<compile_context>
chip_gen: v6e
topology: v6e:2x2x1
jax: 0.10.0
libtpu: 0.0.40
codegen_flags: <defaults>
</compile_context>

<pallas_src>
import jax
import jax.numpy as jnp
from jax.experimental import pallas as pl
from jax.experimental.pallas import tpu as pltpu


# ---------------------------------------------------------------------------
# Fused CBAM kernel (one grid step == one batch element)
# ---------------------------------------------------------------------------
def _cbam_kernel(x_ref, w1m_ref, b1m_ref, w2m_ref, b2m_ref,
                 w1a_ref, b1a_ref, w2a_ref, b2a_ref,
                 tmax_ref, tavg_ref, bconv_ref, o_ref):
    C = x_ref.shape[1]
    HW = x_ref.shape[2]
    x = x_ref[0].astype(jnp.float32)                          # (C, HW)

    def _sigmoid(v):
        return 1.0 / (1.0 + jnp.exp(-v))

    # ---- Channel attention -------------------------------------------------
    ch_max = jnp.max(x, axis=1, keepdims=True)                # (C, 1)
    ch_avg = jnp.sum(x, axis=1, keepdims=True) * (1.0 / HW)   # (C, 1)

    def _mlp(s, w1, b1, w2, b2):
        # s: (C, 1);  w1: (Cr, C);  w2: (C, Cr)  (PyTorch (out, in) layout)
        h = jnp.maximum(
            jnp.dot(w1, s, preferred_element_type=jnp.float32) + b1, 0.0)
        return _sigmoid(
            jnp.dot(w2, h, preferred_element_type=jnp.float32) + b2)

    mw = _mlp(ch_max, w1m_ref[...], b1m_ref[...], w2m_ref[...], b2m_ref[...])
    aw = _mlp(ch_avg, w1a_ref[...], b1a_ref[...], w2a_ref[...], b2a_ref[...])
    cw = _sigmoid(mw + aw)                                    # (C, 1)
    xw = x * cw                                               # (C, HW)

    # ---- Spatial attention ---------------------------------------------------
    sp_max = jnp.max(xw, axis=0, keepdims=True)               # (1, HW)
    sp_avg = jnp.sum(xw, axis=0, keepdims=True) * (1.0 / C)   # (1, HW)
    conv = (jnp.dot(sp_max, tmax_ref[...], preferred_element_type=jnp.float32)
            + jnp.dot(sp_avg, tavg_ref[...], preferred_element_type=jnp.float32)
            + bconv_ref[...])                                 # (1, HW)
    ms = _sigmoid(conv)                                       # (1, HW)

    o_ref[0] = (xw * ms).astype(o_ref.dtype)                  # (C, HW)


# ---------------------------------------------------------------------------
# Parameter-side preprocessing: 7x7 conv (2->1, pad=3) as Toeplitz matmuls
# ---------------------------------------------------------------------------
def _conv7x7_toeplitz(wconv, H, W):
    """wconv: (1, 2, 7, 7).  Returns M_max, M_avg of shape (HW, HW) such that
    out_flat = map_flat @ M_c reproduces Conv2d(2, 1, 7, padding=3) exactly
    (rows = input pixel q, cols = output pixel p)."""
    HW = H * W
    idx = jnp.arange(HW)
    pi, pj = idx // W, idx % W
    di = pi[:, None] - pi[None, :]            # di[q, p] = i_q - i_p
    dj = pj[:, None] - pj[None, :]
    valid = (jnp.abs(di) <= 3) & (jnp.abs(dj) <= 3)
    ky = jnp.clip(di + 3, 0, 6)
    kx = jnp.clip(dj + 3, 0, 6)
    t_max = jnp.where(valid, wconv[0, 0][ky, kx], 0.0).astype(jnp.float32)
    t_avg = jnp.where(valid, wconv[0, 1][ky, kx], 0.0).astype(jnp.float32)
    return t_max, t_avg


# ---------------------------------------------------------------------------
# Wrapper
# ---------------------------------------------------------------------------
@jax.jit
def cbam_forward(x_nchw, params):
    N, C, H, W = x_nchw.shape
    HW = H * W
    Cr = params["w1m"].shape[0]
    t_max, t_avg = _conv7x7_toeplitz(params["wconv"], H, W)
    xf = x_nchw.reshape(N, C, HW).astype(jnp.float32)

    def const(shape):
        return pl.BlockSpec(shape, lambda n: (0,) * len(shape))

    out = pl.pallas_call(
        _cbam_kernel,
        out_shape=jax.ShapeDtypeStruct((N, C, HW), jnp.float32),
        grid=(N,),
        in_specs=[
            pl.BlockSpec((1, C, HW), lambda n: (n, 0, 0)),   # x
            const((Cr, C)), const((Cr, 1)),                  # fc_MaxPool layer 1
            const((C, Cr)), const((C, 1)),                   # fc_MaxPool layer 2
            const((Cr, C)), const((Cr, 1)),                  # fc_AvgPool layer 1
            const((C, Cr)), const((C, 1)),                   # fc_AvgPool layer 2
            const((HW, HW)), const((HW, HW)),                # conv Toeplitz (max, avg)
            const((1, 1)),                                   # conv bias
        ],
        out_specs=pl.BlockSpec((1, C, HW), lambda n: (n, 0, 0)),
        compiler_params=pltpu.CompilerParams(
            dimension_semantics=("parallel",)),
    )(xf,
      params["w1m"], params["b1m"], params["w2m"], params["b2m"],
      params["w1a"], params["b1a"], params["w2a"], params["b2a"],
      t_max, t_avg, params["bconv"])
    return out.reshape(N, C, H, W)


# ---------------------------------------------------------------------------
# Pure-JAX reference (independent formulation, for correctness checking)
# ---------------------------------------------------------------------------
def _sigmoid(v):
    return 1.0 / (1.0 + jnp.exp(-v))


def cbam_reference(x, params):
    xm = jnp.max(x, axis=(2, 3))                              # (N, C)
    xa = jnp.mean(x, axis=(2, 3))

    def mlp(v, w1, b1, w2, b2):
        h = jnp.maximum(v @ w1.T + b1.reshape(1, -1), 0.0)
        return _sigmoid(h @ w2.T + b2.reshape(1, -1))

    mw = mlp(xm, params["w1m"], params["b1m"], params["w2m"], params["b2m"])
    aw = mlp(xa, params["w1a"], params["b1a"], params["w2a"], params["b2a"])
    cw = _sigmoid(mw + aw)                                    # (N, C)
    xw = x * cw[:, :, None, None]

    spm = jnp.max(xw, axis=1, keepdims=True)
    spa = jnp.mean(xw, axis=1, keepdims=True)
    cat = jnp.concatenate([spm, spa], axis=1)                 # (N, 2, H, W)
    conv = jax.lax.conv_general_dilated(
        cat, params["wconv"], window_strides=(1, 1),
        padding=((3, 3), (3, 3)),
        dimension_numbers=("NCHW", "OIHW", "NCHW"))
    conv = conv + params["bconv"].reshape(1, 1, 1, 1)
    return xw * _sigmoid(conv)


# ---------------------------------------------------------------------------
# Parameter init (PyTorch-style Linear/Conv layouts and fan-in uniform init)
# ---------------------------------------------------------------------------
def init_cbam_params(key, c, r=0.5):
    cr = max(int(c * r), 1)
    ks = jax.random.split(key, 10)

    def u(k, fan_in, shape):
        b = 1.0 / (fan_in ** 0.5)
        return jax.random.uniform(k, shape, jnp.float32, -b, b)

    return {
        "w1m": u(ks[0], c, (cr, c)),  "b1m": u(ks[1], c, (cr, 1)),
        "w2m": u(ks[2], cr, (c, cr)), "b2m": u(ks[3], cr, (c, 1)),
        "w1a": u(ks[4], c, (cr, c)),  "b1a": u(ks[5], c, (cr, 1)),
        "w2a": u(ks[6], cr, (c, cr)), "b2a": u(ks[7], cr, (c, 1)),
        "wconv": u(ks[8], 2 * 7 * 7, (1, 2, 7, 7)),
        "bconv": u(ks[9], 2 * 7 * 7, (1, 1)),
    }


# ---------------------------------------------------------------------------
if __name__ == "__main__":
    key = jax.random.PRNGKey(0)
    kx, kp = jax.random.split(key)

    N, C, H, W = 2, 4, 16, 16
    x = jax.random.normal(kx, (N, C, H, W), jnp.float32)
    params = init_cbam_params(kp, C)

    out = cbam_forward(x, params)
    jax.block_until_ready(out)

    assert out.shape == (N, C, H, W), out.shape
    assert bool(jnp.all(jnp.isfinite(out)))

    ref = cbam_reference(x, params)
    err = float(jnp.max(jnp.abs(out - ref)))
    assert err < 2e-2, f"max abs error vs reference: {err}"

    print("KERNEL_OK")
</pallas_src>

<mosaic_0001>
module attributes {stable_mosaic.version = 11 : i64} {
  func.func @_cbam_kernel(%arg0: i32, %arg1: memref<1x4x256xf32, #tpu.memory_space<vmem>>, %arg2: memref<2x4xf32, #tpu.memory_space<vmem>>, %arg3: memref<2x1xf32, #tpu.memory_space<vmem>>, %arg4: memref<4x2xf32, #tpu.memory_space<vmem>>, %arg5: memref<4x1xf32, #tpu.memory_space<vmem>>, %arg6: memref<2x4xf32, #tpu.memory_space<vmem>>, %arg7: memref<2x1xf32, #tpu.memory_space<vmem>>, %arg8: memref<4x2xf32, #tpu.memory_space<vmem>>, %arg9: memref<4x1xf32, #tpu.memory_space<vmem>>, %arg10: memref<256x256xf32, #tpu.memory_space<vmem>>, %arg11: memref<256x256xf32, #tpu.memory_space<vmem>>, %arg12: memref<1x1xf32, #tpu.memory_space<vmem>>, %arg13: memref<1x4x256xf32, #tpu.memory_space<vmem>>) attributes {dimension_semantics = [#tpu.dimension_semantics<parallel>], iteration_bounds = array<i64: 2>, scalar_prefetch = 0 : i64, scratch_operands = 0 : i64, tpu.core_type = #tpu.core_type<tc>, window_params = [{transform_indices = @transform_0, window_bounds = array<i64: 1, 4, 256>}, {pipeline_mode = #tpu.pipeline_mode<synchronous>, transform_indices = @transform_1, window_bounds = array<i64: 2, 4>}, {pipeline_mode = #tpu.pipeline_mode<synchronous>, transform_indices = @transform_2, window_bounds = array<i64: 2, 1>}, {pipeline_mode = #tpu.pipeline_mode<synchronous>, transform_indices = @transform_3, window_bounds = array<i64: 4, 2>}, {pipeline_mode = #tpu.pipeline_mode<synchronous>, transform_indices = @transform_4, window_bounds = array<i64: 4, 1>}, {pipeline_mode = #tpu.pipeline_mode<synchronous>, transform_indices = @transform_5, window_bounds = array<i64: 2, 4>}, {pipeline_mode = #tpu.pipeline_mode<synchronous>, transform_indices = @transform_6, window_bounds = array<i64: 2, 1>}, {pipeline_mode = #tpu.pipeline_mode<synchronous>, transform_indices = @transform_7, window_bounds = array<i64: 4, 2>}, {pipeline_mode = #tpu.pipeline_mode<synchronous>, transform_indices = @transform_8, window_bounds = array<i64: 4, 1>}, {pipeline_mode = #tpu.pipeline_mode<synchronous>, transform_indices = @transform_9, window_bounds = array<i64: 256, 256>}, {pipeline_mode = #tpu.pipeline_mode<synchronous>, transform_indices = @transform_10, window_bounds = array<i64: 256, 256>}, {pipeline_mode = #tpu.pipeline_mode<synchronous>, transform_indices = @transform_11, window_bounds = array<i64: 1, 1>}, {transform_indices = @transform_12, window_bounds = array<i64: 1, 4, 256>}]} {
    %c0 = arith.constant 0 : index
    %c0_0 = arith.constant 0 : index
    %c0_1 = arith.constant 0 : index
    %0 = vector.load %arg1[%c0, %c0_0, %c0_1] : memref<1x4x256xf32, #tpu.memory_space<vmem>>, vector<1x4x256xf32>
    %1 = vector.shape_cast %0 : vector<1x4x256xf32> to vector<4x256xf32>
    %cst = arith.constant dense<0xFF800000> : vector<4xf32>
    %2 = vector.multi_reduction <maximumf>, %1, %cst [1] : vector<4x256xf32> to vector<4xf32>
    %3 = vector.shape_cast %2 : vector<4xf32> to vector<4x1xf32>
    %cst_2 = arith.constant dense<0.000000e+00> : vector<4xf32>
    %4 = vector.multi_reduction <add>, %1, %cst_2 [1] : vector<4x256xf32> to vector<4xf32>
    %5 = vector.shape_cast %4 : vector<4xf32> to vector<4x1xf32>
    %cst_3 = arith.constant 3.906250e-03 : f32
    %6 = vector.broadcast %cst_3 : f32 to vector<4x1xf32>
    %7 = arith.mulf %5, %6 : vector<4x1xf32>
    %c0_4 = arith.constant 0 : index
    %c0_5 = arith.constant 0 : index
    %8 = vector.load %arg2[%c0_4, %c0_5] : memref<2x4xf32, #tpu.memory_space<vmem>>, vector<2x4xf32>
    %c0_6 = arith.constant 0 : index
    %c0_7 = arith.constant 0 : index
    %9 = vector.load %arg3[%c0_6, %c0_7] : memref<2x1xf32, #tpu.memory_space<vmem>>, vector<2x1xf32>
    %c0_8 = arith.constant 0 : index
    %c0_9 = arith.constant 0 : index
    %10 = vector.load %arg4[%c0_8, %c0_9] : memref<4x2xf32, #tpu.memory_space<vmem>>, vector<4x2xf32>
    %c0_10 = arith.constant 0 : index
    %c0_11 = arith.constant 0 : index
    %11 = vector.load %arg5[%c0_10, %c0_11] : memref<4x1xf32, #tpu.memory_space<vmem>>, vector<4x1xf32>
    %cst_12 = arith.constant dense<0.000000e+00> : vector<2x1xf32>
    %12 = tpu.matmul %8, %3, %cst_12 {dimension_numbers = #tpu.dot_dimension_numbers<[1], [0], [0], [1], [0, 0, 1, 1], [], []>} : vector<2x4xf32>, vector<4x1xf32>, vector<2x1xf32> -> vector<2x1xf32>
    %13 = arith.addf %12, %9 : vector<2x1xf32>
    %cst_13 = arith.constant 0.000000e+00 : f32
    %14 = vector.broadcast %cst_13 : f32 to vector<2x1xf32>
    %15 = arith.maximumf %13, %14 : vector<2x1xf32>
    %cst_14 = arith.constant dense<0.000000e+00> : vector<4x1xf32>
    %16 = tpu.matmul %10, %15, %cst_14 {dimension_numbers = #tpu.dot_dimension_numbers<[1], [0], [0], [1], [0, 0, 1, 1], [], []>} : vector<4x2xf32>, vector<2x1xf32>, vector<4x1xf32> -> vector<4x1xf32>
    %17 = arith.addf %16, %11 : vector<4x1xf32>
    %cst_15 = arith.constant 0.000000e+00 : f32
    %18 = vector.broadcast %cst_15 : f32 to vector<4x1xf32>
    %19 = arith.subf %18, %17 : vector<4x1xf32>
    %20 = math.exp %19 : vector<4x1xf32>
    %cst_16 = arith.constant 1.000000e+00 : f32
    %21 = vector.broadcast %cst_16 : f32 to vector<4x1xf32>
    %22 = arith.addf %21, %20 : vector<4x1xf32>
    %cst_17 = arith.constant 1.000000e+00 : f32
    %23 = vector.broadcast %cst_17 : f32 to vector<4x1xf32>
    %24 = arith.divf %23, %22 : vector<4x1xf32>
    %c0_18 = arith.constant 0 : index
    %c0_19 = arith.constant 0 : index
    %25 = vector.load %arg6[%c0_18, %c0_19] : memref<2x4xf32, #tpu.memory_space<vmem>>, vector<2x4xf32>
    %c0_20 = arith.constant 0 : index
    %c0_21 = arith.constant 0 : index
    %26 = vector.load %arg7[%c0_20, %c0_21] : memref<2x1xf32, #tpu.memory_space<vmem>>, vector<2x1xf32>
    %c0_22 = arith.constant 0 : index
    %c0_23 = arith.constant 0 : index
    %27 = vector.load %arg8[%c0_22, %c0_23] : memref<4x2xf32, #tpu.memory_space<vmem>>, vector<4x2xf32>
    %c0_24 = arith.constant 0 : index
    %c0_25 = arith.constant 0 : index
    %28 = vector.load %arg9[%c0_24, %c0_25] : memref<4x1xf32, #tpu.memory_space<vmem>>, vector<4x1xf32>
    %cst_26 = arith.constant dense<0.000000e+00> : vector<2x1xf32>
    %29 = tpu.matmul %25, %7, %cst_26 {dimension_numbers = #tpu.dot_dimension_numbers<[1], [0], [0], [1], [0, 0, 1, 1], [], []>} : vector<2x4xf32>, vector<4x1xf32>, vector<2x1xf32> -> vector<2x1xf32>
    %30 = arith.addf %29, %26 : vector<2x1xf32>
    %cst_27 = arith.constant 0.000000e+00 : f32
    %31 = vector.broadcast %cst_27 : f32 to vector<2x1xf32>
    %32 = arith.maximumf %30, %31 : vector<2x1xf32>
    %cst_28 = arith.constant dense<0.000000e+00> : vector<4x1xf32>
    %33 = tpu.matmul %27, %32, %cst_28 {dimension_numbers = #tpu.dot_dimension_numbers<[1], [0], [0], [1], [0, 0, 1, 1], [], []>} : vector<4x2xf32>, vector<2x1xf32>, vector<4x1xf32> -> vector<4x1xf32>
    %34 = arith.addf %33, %28 : vector<4x1xf32>
    %cst_29 = arith.constant 0.000000e+00 : f32
    %35 = vector.broadcast %cst_29 : f32 to vector<4x1xf32>
    %36 = arith.subf %35, %34 : vector<4x1xf32>
    %37 = math.exp %36 : vector<4x1xf32>
    %cst_30 = arith.constant 1.000000e+00 : f32
    %38 = vector.broadcast %cst_30 : f32 to vector<4x1xf32>
    %39 = arith.addf %38, %37 : vector<4x1xf32>
    %cst_31 = arith.constant 1.000000e+00 : f32
    %40 = vector.broadcast %cst_31 : f32 to vector<4x1xf32>
    %41 = arith.divf %40, %39 : vector<4x1xf32>
    %42 = arith.addf %24, %41 : vector<4x1xf32>
    %cst_32 = arith.constant 0.000000e+00 : f32
    %43 = vector.broadcast %cst_32 : f32 to vector<4x1xf32>
    %44 = arith.subf %43, %42 : vector<4x1xf32>
    %45 = math.exp %44 : vector<4x1xf32>
    %cst_33 = arith.constant 1.000000e+00 : f32
    %46 = vector.broadcast %cst_33 : f32 to vector<4x1xf32>
    %47 = arith.addf %46, %45 : vector<4x1xf32>
    %cst_34 = arith.constant 1.000000e+00 : f32
    %48 = vector.broadcast %cst_34 : f32 to vector<4x1xf32>
    %49 = arith.divf %48, %47 : vector<4x1xf32>
    %50 = vector.broadcast %49 : vector<4x1xf32> to vector<4x256xf32>
    %51 = arith.mulf %1, %50 : vector<4x256xf32>
    %cst_35 = arith.constant dense<0xFF800000> : vector<256xf32>
    %52 = vector.multi_reduction <maximumf>, %51, %cst_35 [0] : vector<4x256xf32> to vector<256xf32>
    %53 = vector.shape_cast %52 : vector<256xf32> to vector<1x256xf32>
    %cst_36 = arith.constant dense<0.000000e+00> : vector<256xf32>
    %54 = vector.multi_reduction <add>, %51, %cst_36 [0] : vector<4x256xf32> to vector<256xf32>
    %55 = vector.shape_cast %54 : vector<256xf32> to vector<1x256xf32>
    %cst_37 = arith.constant 2.500000e-01 : f32
    %56 = vector.broadcast %cst_37 : f32 to vector<1x256xf32>
    %57 = arith.mulf %55, %56 : vector<1x256xf32>
    %c0_38 = arith.constant 0 : index
    %c0_39 = arith.constant 0 : index
    %58 = vector.load %arg10[%c0_38, %c0_39] : memref<256x256xf32, #tpu.memory_space<vmem>>, vector<256x256xf32>
    %cst_40 = arith.constant dense<0.000000e+00> : vector<1x256xf32>
    %59 = tpu.matmul %53, %58, %cst_40 {dimension_numbers = #tpu.dot_dimension_numbers<[1], [0], [0], [1], [0, 0, 1, 1], [], []>} : vector<1x256xf32>, vector<256x256xf32>, vector<1x256xf32> -> vector<1x256xf32>
    %c0_41 = arith.constant 0 : index
    %c0_42 = arith.constant 0 : index
    %60 = vector.load %arg11[%c0_41, %c0_42] : memref<256x256xf32, #tpu.memory_space<vmem>>, vector<256x256xf32>
    %cst_43 = arith.constant dense<0.000000e+00> : vector<1x256xf32>
    %61 = tpu.matmul %57, %60, %cst_43 {dimension_numbers = #tpu.dot_dimension_numbers<[1], [0], [0], [1], [0, 0, 1, 1], [], []>} : vector<1x256xf32>, vector<256x256xf32>, vector<1x256xf32> -> vector<1x256xf32>
    %62 = arith.addf %59, %61 : vector<1x256xf32>
    %c0_44 = arith.constant 0 : index
    %c0_45 = arith.constant 0 : index
    %63 = vector.load %arg12[%c0_44, %c0_45] : memref<1x1xf32, #tpu.memory_space<vmem>>, vector<1x1xf32>
    %64 = vector.broadcast %63 : vector<1x1xf32> to vector<1x256xf32>
    %65 = arith.addf %62, %64 : vector<1x256xf32>
    %cst_46 = arith.constant 0.000000e+00 : f32
    %66 = vector.broadcast %cst_46 : f32 to vector<1x256xf32>
    %67 = arith.subf %66, %65 : vector<1x256xf32>
    %68 = math.exp %67 : vector<1x256xf32>
    %cst_47 = arith.constant 1.000000e+00 : f32
    %69 = vector.broadcast %cst_47 : f32 to vector<1x256xf32>
    %70 = arith.addf %69, %68 : vector<1x256xf32>
    %cst_48 = arith.constant 1.000000e+00 : f32
    %71 = vector.broadcast %cst_48 : f32 to vector<1x256xf32>
    %72 = arith.divf %71, %70 : vector<1x256xf32>
    %73 = vector.broadcast %72 : vector<1x256xf32> to vector<4x256xf32>
    %74 = arith.mulf %51, %73 : vector<4x256xf32>
    %c0_49 = arith.constant 0 : index
    %c0_50 = arith.constant 0 : index
    %c0_51 = arith.constant 0 : index
    %75 = vector.load %arg13[%c0_49, %c0_50, %c0_51] : memref<1x4x256xf32, #tpu.memory_space<vmem>>, vector<1x4x256xf32>
    %76 = vector.shape_cast %75 : vector<1x4x256xf32> to vector<4x256xf32>
    %77 = vector.shape_cast %74 : vector<4x256xf32> to vector<1x4x256xf32>
    tpu.vector_store %arg13[%c0_49, %c0_50, %c0_51], %77 {strides = array<i32>} : memref<1x4x256xf32, #tpu.memory_space<vmem>>, vector<1x4x256xf32>,
    return
  }
  func.func @transform_0(%arg0: i32) -> (i32, i32, i32) {
    %c0_i32 = arith.constant 0 : i32
    %c0_i32_0 = arith.constant 0 : i32
    %c0_i32_1 = arith.constant 0 : i32
    return %arg0, %c0_i32, %c0_i32_0 : i32, i32, i32
  }
  func.func @transform_1(%arg0: i32) -> (i32, i32) {
    %c0_i32 = arith.constant 0 : i32
    %c0_i32_0 = arith.constant 0 : i32
    %c0_i32_1 = arith.constant 0 : i32
    return %c0_i32, %c0_i32_0 : i32, i32
  }
  func.func @transform_2(%arg0: i32) -> (i32, i32) {
    %c0_i32 = arith.constant 0 : i32
    %c0_i32_0 = arith.constant 0 : i32
    %c0_i32_1 = arith.constant 0 : i32
    return %c0_i32, %c0_i32_0 : i32, i32
  }
  func.func @transform_3(%arg0: i32) -> (i32, i32) {
    %c0_i32 = arith.constant 0 : i32
    %c0_i32_0 = arith.constant 0 : i32
    %c0_i32_1 = arith.constant 0 : i32
    return %c0_i32, %c0_i32_0 : i32, i32
  }
  func.func @transform_4(%arg0: i32) -> (i32, i32) {
    %c0_i32 = arith.constant 0 : i32
    %c0_i32_0 = arith.constant 0 : i32
    %c0_i32_1 = arith.constant 0 : i32
    return %c0_i32, %c0_i32_0 : i32, i32
  }
  func.func @transform_5(%arg0: i32) -> (i32, i32) {
    %c0_i32 = arith.constant 0 : i32
    %c0_i32_0 = arith.constant 0 : i32
    %c0_i32_1 = arith.constant 0 : i32
    return %c0_i32, %c0_i32_0 : i32, i32
  }
  func.func @transform_6(%arg0: i32) -> (i32, i32) {
    %c0_i32 = arith.constant 0 : i32
    %c0_i32_0 = arith.constant 0 : i32
    %c0_i32_1 = arith.constant 0 : i32
    return %c0_i32, %c0_i32_0 : i32, i32
  }
  func.func @transform_7(%arg0: i32) -> (i32, i32) {
    %c0_i32 = arith.constant 0 : i32
    %c0_i32_0 = arith.constant 0 : i32
    %c0_i32_1 = arith.constant 0 : i32
    return %c0_i32, %c0_i32_0 : i32, i32
  }
  func.func @transform_8(%arg0: i32) -> (i32, i32) {
    %c0_i32 = arith.constant 0 : i32
    %c0_i32_0 = arith.constant 0 : i32
    %c0_i32_1 = arith.constant 0 : i32
    return %c0_i32, %c0_i32_0 : i32, i32
  }
  func.func @transform_9(%arg0: i32) -> (i32, i32) {
    %c0_i32 = arith.constant 0 : i32
    %c0_i32_0 = arith.constant 0 : i32
    %c0_i32_1 = arith.constant 0 : i32
    return %c0_i32, %c0_i32_0 : i32, i32
  }
  func.func @transform_10(%arg0: i32) -> (i32, i32) {
    %c0_i32 = arith.constant 0 : i32
    %c0_i32_0 = arith.constant 0 : i32
    %c0_i32_1 = arith.constant 0 : i32
    return %c0_i32, %c0_i32_0 : i32, i32
  }
  func.func @transform_11(%arg0: i32) -> (i32, i32) {
    %c0_i32 = arith.constant 0 : i32
    %c0_i32_0 = arith.constant 0 : i32
    %c0_i32_1 = arith.constant 0 : i32
    return %c0_i32, %c0_i32_0 : i32, i32
  }
  func.func @transform_12(%arg0: i32) -> (i32, i32, i32) {
    %c0_i32 = arith.constant 0 : i32
    %c0_i32_0 = arith.constant 0 : i32
    %c0_i32_1 = arith.constant 0 : i32
    return %arg0, %c0_i32, %c0_i32_0 : i32, i32, i32
  }
}

</mosaic_0001>

<llo_original>
// kernel: cbam_forward.1
$region0: #{cbam_forward.1}
  #allocation0 [shape = 'u32[]', space=smem, size = 0x4, offset = 0x4, fixed_abs, tag = 'smem constant byte address 0x4 - core index']
  #allocation1 [shape = 'u32[144,128]{1,0:T(1,128)}', space=vmem, size = 0x12000, scoped, tag = 'internal scratch']
  #allocation2 [shape = 'f32[1,1]{1,0:T(1,128)S(1)}', space=vmem, size = 0x200, scoped, tag = 'scoped memory for cbam_forward.1']
  %s0 = inlined_call_operand.vmem [shape: f32[2,4,256], index: 0, kind: input, shape index: {}]
  %s1 = inlined_call_operand.vmem [shape: f32[2,4], index: 1, kind: input, shape index: {}]
  %s2 = inlined_call_operand.vmem [shape: f32[2,1], index: 2, kind: input, shape index: {}]
  %s3 = inlined_call_operand.vmem [shape: f32[4,2], index: 3, kind: input, shape index: {}]
  %s4 = inlined_call_operand.vmem [shape: f32[4,1], index: 4, kind: input, shape index: {}]
  %s5 = inlined_call_operand.vmem [shape: f32[2,4], index: 5, kind: input, shape index: {}]
  %s6 = inlined_call_operand.vmem [shape: f32[2,1], index: 6, kind: input, shape index: {}]
  %s7 = inlined_call_operand.vmem [shape: f32[4,2], index: 7, kind: input, shape index: {}]
  %s8 = inlined_call_operand.vmem [shape: f32[4,1], index: 8, kind: input, shape index: {}]
  %s9 = inlined_call_operand.vmem [shape: f32[256,256], index: 9, kind: input, shape index: {}]
  %s10 = inlined_call_operand.vmem [shape: f32[256,256], index: 10, kind: input, shape index: {}]
  %s11 = inlined_call_operand.<no memory space> [shape: f32[1,1], index: 11, kind: input, shape index: {}]
  %s12 = inlined_call_operand.vmem [shape: f32[2,4,256], index: 12, kind: output, shape index: {}]
  %s13 = sld [smem:[#allocation0]]
  $region81: #{cbam_forward.1} parent=0
    _
  %s15 = ssub.s32 1, %s13
  %s16 = scalar_select 0, %s15, %s13
  %v17 = vstv %s11
  %18 = vst [vmem:[#allocation2] sm:$0x1] %v17
  loop: start=0, step=1, limit=4
  $region2: #{cbam_forward.1} parent=0 // loop_pre_header
    _
  $region3: #{cbam_forward.1} parent=0 // loop_header
    %s20 = sphi 0, %s24
    %p21 = scmp.ge.s32.totalorder %s20, 4
    %s30 = sphi 0, %s32
    %s33 = sphi 0, %s30
    %s34 = sphi 0, %s33
    %s50 = sphi 0, %s34
    %s54 = sphi 0, %s54
    %s56 = sphi 0, %s54
    %s57 = sphi 0, %s56
    %s71 = sphi 0, %s57
    %s75 = sphi 0, %s75
    %s77 = sphi 0, %s75
    %s78 = sphi 0, %s77
    %s92 = sphi 0, %s78
    %s96 = sphi 0, %s96
    %s98 = sphi 0, %s96
    %s99 = sphi 0, %s98
    %s113 = sphi 0, %s99
    %s117 = sphi 0, %s117
    %s119 = sphi 0, %s117
    %s120 = sphi 0, %s119
    %s134 = sphi 0, %s120
    %s138 = sphi 0, %s138
    %s140 = sphi 0, %s138
    %s141 = sphi 0, %s140
    %s155 = sphi 0, %s141
    %s159 = sphi 0, %s159
    %s161 = sphi 0, %s159
    %s162 = sphi 0, %s161
    %s176 = sphi 0, %s162
    %s180 = sphi 0, %s180
    %s182 = sphi 0, %s180
    %s183 = sphi 0, %s182
    %s197 = sphi 0, %s183
    %s201 = sphi 0, %s201
    %s203 = sphi 0, %s201
    %s204 = sphi 0, %s203
    %s218 = sphi 0, %s204
    %s222 = sphi 0, %s222
    %s224 = sphi 0, %s222
    %s225 = sphi 0, %s224
    %s239 = sphi 0, %s225
    %s243 = sphi 0, %s243
    %s245 = sphi 0, %s243
    %s246 = sphi 0, %s245
    %s260 = sphi 0, %s246
    %s264 = sphi 0, %s264
    %s266 = sphi 0, %s264
    %s267 = sphi 0, %s266
    %s281 = sphi 0, %s267
    %s287 = sphi 0, %s289
    %s290 = sphi 0, %s287
    %s291 = sphi 0, %s290
    %s307 = sphi 0, %s291
  $region4: #{cbam_forward.1} parent=0 // loop_header_branch
    %23 = sbr.rel (%p21) target = $region8
  $region5: #{cbam_forward.1} parent=0 // loop_body
    %s25 = ssub.s32 %s20, 1
    %s26 = ssub.s32 %s20, 2
    %s27 = sadd.s32 %s20, 1
    %s28 = ssub.s32 %s20, %s27
    %p29 = scmp.eq.s32.totalorder %s28, 0
    %s31 = sadd.s32 %s30, 1
    %s32 = scalar_select %p29, %s30, %s31
    %p35 = pneg %p29
    %p36 = scmp.eq.s32.totalorder %s20, 1
    %p37 = por %p35, %p36
    %p38 = scmp.ne.s32.totalorder %s30, %s33
    %p39 = scmp.eq.s32.totalorder %s20, 0
    %p40 = por %p38, %p39
    %p41 = scmp.ne.s32.totalorder %s30, %s33
    %p42 = scmp.eq.s32.totalorder %s25, 1
    %p43 = por %p41, %p42
    %p44 = scmp.ne.s32.totalorder %s33, %s34
    %p45 = scmp.eq.s32.totalorder %s25, 0
    %p46 = por %p44, %p45
    %p47 = scmp.ne.s32.totalorder %s33, %s34
    %p48 = scmp.eq.s32.totalorder %s26, 1
    %p49 = por %p47, %p48
    %p51 = scmp.ne.s32.totalorder %s34, %s50
    %p52 = scmp.eq.s32.totalorder %s26, 0
    %p53 = por %p51, %p52
    %s55 = sadd.s32 %s54, 1
    %p58 = scmp.eq.s32.totalorder %s20, 1
    %p59 = scmp.ne.s32.totalorder %s54, %s56
    %p60 = scmp.eq.s32.totalorder %s20, 0
    %p61 = por %p59, %p60
    %p62 = scmp.ne.s32.totalorder %s54, %s56
    %p63 = scmp.eq.s32.totalorder %s25, 1
    %p64 = por %p62, %p63
    %p65 = scmp.ne.s32.totalorder %s56, %s57
    %p66 = scmp.eq.s32.totalorder %s25, 0
    %p67 = por %p65, %p66
    %p68 = scmp.ne.s32.totalorder %s56, %s57
    %p69 = scmp.eq.s32.totalorder %s26, 1
    %p70 = por %p68, %p69
    %p72 = scmp.ne.s32.totalorder %s57, %s71
    %p73 = scmp.eq.s32.totalorder %s26, 0
    %p74 = por %p72, %p73
    %s76 = sadd.s32 %s75, 1
    %p79 = scmp.eq.s32.totalorder %s20, 1
    %p80 = scmp.ne.s32.totalorder %s75, %s77
    %p81 = scmp.eq.s32.totalorder %s20, 0
    %p82 = por %p80, %p81
    %p83 = scmp.ne.s32.totalorder %s75, %s77
    %p84 = scmp.eq.s32.totalorder %s25, 1
    %p85 = por %p83, %p84
    %p86 = scmp.ne.s32.totalorder %s77, %s78
    %p87 = scmp.eq.s32.totalorder %s25, 0
    %p88 = por %p86, %p87
    %p89 = scmp.ne.s32.totalorder %s77, %s78
    %p90 = scmp.eq.s32.totalorder %s26, 1
    %p91 = por %p89, %p90
    %p93 = scmp.ne.s32.totalorder %s78, %s92
    %p94 = scmp.eq.s32.totalorder %s26, 0
    %p95 = por %p93, %p94
    %s97 = sadd.s32 %s96, 1
    %p100 = scmp.eq.s32.totalorder %s20, 1
    %p101 = scmp.ne.s32.totalorder %s96, %s98
    %p102 = scmp.eq.s32.totalorder %s20, 0
    %p103 = por %p101, %p102
    %p104 = scmp.ne.s32.totalorder %s96, %s98
    %p105 = scmp.eq.s32.totalorder %s25, 1
    %p106 = por %p104, %p105
    %p107 = scmp.ne.s32.totalorder %s98, %s99
    %p108 = scmp.eq.s32.totalorder %s25, 0
    %p109 = por %p107, %p108
    %p110 = scmp.ne.s32.totalorder %s98, %s99
    %p111 = scmp.eq.s32.totalorder %s26, 1
    %p112 = por %p110, %p111
    %p114 = scmp.ne.s32.totalorder %s99, %s113
    %p115 = scmp.eq.s32.totalorder %s26, 0
    %p116 = por %p114, %p115
    %s118 = sadd.s32 %s117, 1
    %p121 = scmp.eq.s32.totalorder %s20, 1
    %p122 = scmp.ne.s32.totalorder %s117, %s119
    %p123 = scmp.eq.s32.totalorder %s20, 0
    %p124 = por %p122, %p123
    %p125 = scmp.ne.s32.totalorder %s117, %s119
    %p126 = scmp.eq.s32.totalorder %s25, 1
    %p127 = por %p125, %p126
    %p128 = scmp.ne.s32.totalorder %s119, %s120
    %p129 = scmp.eq.s32.totalorder %s25, 0
    %p130 = por %p128, %p129
    %p131 = scmp.ne.s32.totalorder %s119, %s120
    %p132 = scmp.eq.s32.totalorder %s26, 1
    %p133 = por %p131, %p132
    %p135 = scmp.ne.s32.totalorder %s120, %s134
    %p136 = scmp.eq.s32.totalorder %s26, 0
    %p137 = por %p135, %p136
    %s139 = sadd.s32 %s138, 1
    %p142 = scmp.eq.s32.totalorder %s20, 1
    %p143 = scmp.ne.s32.totalorder %s138, %s140
    %p144 = scmp.eq.s32.totalorder %s20, 0
    %p145 = por %p143, %p144
    %p146 = scmp.ne.s32.totalorder %s138, %s140
    %p147 = scmp.eq.s32.totalorder %s25, 1
    %p148 = por %p146, %p147
    %p149 = scmp.ne.s32.totalorder %s140, %s141
    %p150 = scmp.eq.s32.totalorder %s25, 0
    %p151 = por %p149, %p150
    %p152 = scmp.ne.s32.totalorder %s140, %s141
    %p153 = scmp.eq.s32.totalorder %s26, 1
    %p154 = por %p152, %p153
    %p156 = scmp.ne.s32.totalorder %s141, %s155
    %p157 = scmp.eq.s32.totalorder %s26, 0
    %p158 = por %p156, %p157
    %s160 = sadd.s32 %s159, 1
    %p163 = scmp.eq.s32.totalorder %s20, 1
    %p164 = scmp.ne.s32.totalorder %s159, %s161
    %p165 = scmp.eq.s32.totalorder %s20, 0
    %p166 = por %p164, %p165
    %p167 = scmp.ne.s32.totalorder %s159, %s161
    %p168 = scmp.eq.s32.totalorder %s25, 1
    %p169 = por %p167, %p168
    %p170 = scmp.ne.s32.totalorder %s161, %s162
    %p171 = scmp.eq.s32.totalorder %s25, 0
    %p172 = por %p170, %p171
    %p173 = scmp.ne.s32.totalorder %s161, %s162
    %p174 = scmp.eq.s32.totalorder %s26, 1
    %p175 = por %p173, %p174
    %p177 = scmp.ne.s32.totalorder %s162, %s176
    %p178 = scmp.eq.s32.totalorder %s26, 0
    %p179 = por %p177, %p178
    %s181 = sadd.s32 %s180, 1
    %p184 = scmp.eq.s32.totalorder %s20, 1
    %p185 = scmp.ne.s32.totalorder %s180, %s182
    %p186 = scmp.eq.s32.totalorder %s20, 0
    %p187 = por %p185, %p186
    %p188 = scmp.ne.s32.totalorder %s180, %s182
    %p189 = scmp.eq.s32.totalorder %s25, 1
    %p190 = por %p188, %p189
    %p191 = scmp.ne.s32.totalorder %s182, %s183
    %p192 = scmp.eq.s32.totalorder %s25, 0
    %p193 = por %p191, %p192
    %p194 = scmp.ne.s32.totalorder %s182, %s183
    %p195 = scmp.eq.s32.totalorder %s26, 1
    %p196 = por %p194, %p195
    %p198 = scmp.ne.s32.totalorder %s183, %s197
    %p199 = scmp.eq.s32.totalorder %s26, 0
    %p200 = por %p198, %p199
    %s202 = sadd.s32 %s201, 1
    %p205 = scmp.eq.s32.totalorder %s20, 1
    %p206 = scmp.ne.s32.totalorder %s201, %s203
    %p207 = scmp.eq.s32.totalorder %s20, 0
    %p208 = por %p206, %p207
    %p209 = scmp.ne.s32.totalorder %s201, %s203
    %p210 = scmp.eq.s32.totalorder %s25, 1
    %p211 = por %p209, %p210
    %p212 = scmp.ne.s32.totalorder %s203, %s204
    %p213 = scmp.eq.s32.totalorder %s25, 0
    %p214 = por %p212, %p213
    %p215 = scmp.ne.s32.totalorder %s203, %s204
    %p216 = scmp.eq.s32.totalorder %s26, 1
    %p217 = por %p215, %p216
    %p219 = scmp.ne.s32.totalorder %s204, %s218
    %p220 = scmp.eq.s32.totalorder %s26, 0
    %p221 = por %p219, %p220
    %s223 = sadd.s32 %s222, 1
    %p226 = scmp.eq.s32.totalorder %s20, 1
    %p227 = scmp.ne.s32.totalorder %s222, %s224
    %p228 = scmp.eq.s32.totalorder %s20, 0
    %p229 = por %p227, %p228
    %p230 = scmp.ne.s32.totalorder %s222, %s224
    %p231 = scmp.eq.s32.totalorder %s25, 1
    %p232 = por %p230, %p231
    %p233 = scmp.ne.s32.totalorder %s224, %s225
    %p234 = scmp.eq.s32.totalorder %s25, 0
    %p235 = por %p233, %p234
    %p236 = scmp.ne.s32.totalorder %s224, %s225
    %p237 = scmp.eq.s32.totalorder %s26, 1
    %p238 = por %p236, %p237
    %p240 = scmp.ne.s32.totalorder %s225, %s239
    %p241 = scmp.eq.s32.totalorder %s26, 0
    %p242 = por %p240, %p241
    %s244 = sadd.s32 %s243, 1
    %p247 = scmp.eq.s32.totalorder %s20, 1
    %p248 = scmp.ne.s32.totalorder %s243, %s245
    %p249 = scmp.eq.s32.totalorder %s20, 0
    %p250 = por %p248, %p249
    %p251 = scmp.ne.s32.totalorder %s243, %s245
    %p252 = scmp.eq.s32.totalorder %s25, 1
    %p253 = por %p251, %p252
    %p254 = scmp.ne.s32.totalorder %s245, %s246
    %p255 = scmp.eq.s32.totalorder %s25, 0
    %p256 = por %p254, %p255
    %p257 = scmp.ne.s32.totalorder %s245, %s246
    %p258 = scmp.eq.s32.totalorder %s26, 1
    %p259 = por %p257, %p258
    %p261 = scmp.ne.s32.totalorder %s246, %s260
    %p262 = scmp.eq.s32.totalorder %s26, 0
    %p263 = por %p261, %p262
    %s265 = sadd.s32 %s264, 1
    %p268 = scmp.eq.s32.totalorder %s20, 1
    %p269 = scmp.ne.s32.totalorder %s264, %s266
    %p270 = scmp.eq.s32.totalorder %s20, 0
    %p271 = por %p269, %p270
    %p272 = scmp.ne.s32.totalorder %s264, %s266
    %p273 = scmp.eq.s32.totalorder %s25, 1
    %p274 = por %p272, %p273
    %p275 = scmp.ne.s32.totalorder %s266, %s267
    %p276 = scmp.eq.s32.totalorder %s25, 0
    %p277 = por %p275, %p276
    %p278 = scmp.ne.s32.totalorder %s266, %s267
    %p279 = scmp.eq.s32.totalorder %s26, 1
    %p280 = por %p278, %p279
    %p282 = scmp.ne.s32.totalorder %s267, %s281
    %p283 = scmp.eq.s32.totalorder %s26, 0
    %p284 = por %p282, %p283
    %s285 = ssub.s32 %s20, %s27
    %p286 = scmp.eq.s32.totalorder %s285, 0
    %s288 = sadd.s32 %s287, 1
    %s289 = scalar_select %p286, %s287, %s288
    %p292 = pneg %p286
    %p293 = scmp.eq.s32.totalorder %s20, 1
    %p294 = por %p292, %p293
    %p295 = scmp.ne.s32.totalorder %s287, %s290
    %p296 = scmp.eq.s32.totalorder %s20, 0
    %p297 = por %p295, %p296
    %p298 = scmp.ne.s32.totalorder %s287, %s290
    %p299 = scmp.eq.s32.totalorder %s25, 1
    %p300 = por %p298, %p299
    %p301 = scmp.ne.s32.totalorder %s290, %s291
    %p302 = scmp.eq.s32.totalorder %s25, 0
    %p303 = por %p301, %p302
    %p304 = scmp.ne.s32.totalorder %s290, %s291
    %p305 = scmp.eq.s32.totalorder %s26, 1
    %p306 = por %p304, %p305
    %p308 = scmp.ne.s32.totalorder %s291, %s307
    %p309 = scmp.eq.s32.totalorder %s26, 0
    %p310 = por %p308, %p309
    %p311 = scmp.le.s32.totalorder 1, %s20
    %p312 = scmp.lt.s32.totalorder %s20, 3
    %p313 = pnand %p311, %p312
    %p314 = pneg %p313
    // Predicated region
    $region9: #{cbam_forward.1} parent=5 // pred_check
      _
    $region10: #{cbam_forward.1} parent=5 // pred_check_branch
      %316 = sbr.rel (%p313) target = $region12
    $region11: #{cbam_forward.1} parent=5 // pred_region
      %s317 = ssub.s32 %s20, 1
      // Predicated region
      $region13: #{cbam_forward.1} parent=11 // pred_check
        %p318 = pneg %p67
      $region14: #{cbam_forward.1} parent=11 // pred_check_branch
        %320 = sbr.rel (%p318) target = $region16
      $region15: #{cbam_forward.1} parent=11 // pred_region
        _
      $region16: #{cbam_forward.1} parent=11 // pred_fallthru
        _
      // Predicated region
      $region17: #{cbam_forward.1} parent=11 // pred_check
        %p321 = pneg %p88
      $region18: #{cbam_forward.1} parent=11 // pred_check_branch
        %323 = sbr.rel (%p321) target = $region20
      $region19: #{cbam_forward.1} parent=11 // pred_region
        _
      $region20: #{cbam_forward.1} parent=11 // pred_fallthru
        _
      // Predicated region
      $region21: #{cbam_forward.1} parent=11 // pred_check
        %p324 = pneg %p109
      $region22: #{cbam_forward.1} parent=11 // pred_check_branch
        %326 = sbr.rel (%p324) target = $region24
      $region23: #{cbam_forward.1} parent=11 // pred_region
        _
      $region24: #{cbam_forward.1} parent=11 // pred_fallthru
        _
      // Predicated region
      $region25: #{cbam_forward.1} parent=11 // pred_check
        %p327 = pneg %p130
      $region26: #{cbam_forward.1} parent=11 // pred_check_branch
        %329 = sbr.rel (%p327) target = $region28
      $region27: #{cbam_forward.1} parent=11 // pred_region
        _
      $region28: #{cbam_forward.1} parent=11 // pred_fallthru
        _
      // Predicated region
      $region29: #{cbam_forward.1} parent=11 // pred_check
        %p330 = pneg %p151
      $region30: #{cbam_forward.1} parent=11 // pred_check_branch
        %332 = sbr.rel (%p330) target = $region32
      $region31: #{cbam_forward.1} parent=11 // pred_region
        _
      $region32: #{cbam_forward.1} parent=11 // pred_fallthru
        _
      // Predicated region
      $region33: #{cbam_forward.1} parent=11 // pred_check
        %p333 = pneg %p172
      $region34: #{cbam_forward.1} parent=11 // pred_check_branch
        %335 = sbr.rel (%p333) target = $region36
      $region35: #{cbam_forward.1} parent=11 // pred_region
        _
      $region36: #{cbam_forward.1} parent=11 // pred_fallthru
        _
      // Predicated region
      $region37: #{cbam_forward.1} parent=11 // pred_check
        %p336 = pneg %p193
      $region38: #{cbam_forward.1} parent=11 // pred_check_branch
        %338 = sbr.rel (%p336) target = $region40
      $region39: #{cbam_forward.1} parent=11 // pred_region
        _
      $region40: #{cbam_forward.1} parent=11 // pred_fallthru
        _
      // Predicated region
      $region41: #{cbam_forward.1} parent=11 // pred_check
        %p339 = pneg %p214
      $region42: #{cbam_forward.1} parent=11 // pred_check_branch
        %341 = sbr.rel (%p339) target = $region44
      $region43: #{cbam_forward.1} parent=11 // pred_region
        _
      $region44: #{cbam_forward.1} parent=11 // pred_fallthru
        _
      // Predicated region
      $region45: #{cbam_forward.1} parent=11 // pred_check
        %p342 = pneg %p235
      $region46: #{cbam_forward.1} parent=11 // pred_check_branch
        %344 = sbr.rel (%p342) target = $region48
      $region47: #{cbam_forward.1} parent=11 // pred_region
        _
      $region48: #{cbam_forward.1} parent=11 // pred_fallthru
        _
      // Predicated region
      $region49: #{cbam_forward.1} parent=11 // pred_check
        %p345 = pneg %p256
      $region50: #{cbam_forward.1} parent=11 // pred_check_branch
        %347 = sbr.rel (%p345) target = $region52
      $region51: #{cbam_forward.1} parent=11 // pred_region
        _
      $region52: #{cbam_forward.1} parent=11 // pred_fallthru
        _
      // Predicated region
      $region53: #{cbam_forward.1} parent=11 // pred_check
        %p348 = pneg %p277
      $region54: #{cbam_forward.1} parent=11 // pred_check_branch
        %350 = sbr.rel (%p348) target = $region56
      $region55: #{cbam_forward.1} parent=11 // pred_region
        _
      $region56: #{cbam_forward.1} parent=11 // pred_fallthru
        _
    $region12: #{cbam_forward.1} parent=5 // pred_fallthru
      _
    %p351 = scmp.lt.s32.totalorder %s20, 2
    // Predicated region
    $region57: #{cbam_forward.1} parent=5 // pred_check
      %p352 = pneg %p351
    $region58: #{cbam_forward.1} parent=5 // pred_check_branch
      %354 = sbr.rel (%p352) target = $region60
    $region59: #{cbam_forward.1} parent=5 // pred_region
      // Predicated region
      $region61: #{cbam_forward.1} parent=59 // pred_check
        %p355 = pneg %p40
      $region62: #{cbam_forward.1} parent=59 // pred_check_branch
        %357 = sbr.rel (%p355) target = $region64
      $region63: #{cbam_forward.1} parent=59 // pred_region
        %p358 = scmp.lt.s32.totalorder %s20, 1
        %s359 = scalar_select %p358, %s20, 1
        %s360 = smul.addr %s359, 2
        %s361 = smul.addr %s360, 4
        %s362 = scalar_lea.vmem %s0, %s361
      $region64: #{cbam_forward.1} parent=59 // pred_fallthru
        _
    $region60: #{cbam_forward.1} parent=5 // pred_fallthru
      _
    %p363 = scmp.le.s32.totalorder 1, %s20
    %p364 = scmp.lt.s32.totalorder %s20, 3
    %p365 = pnand %p363, %p364
    %p366 = pneg %p365
    // Predicated region
    $region65: #{cbam_forward.1} parent=5 // pred_check
      _
    $region66: #{cbam_forward.1} parent=5 // pred_check_branch
      %368 = sbr.rel (%p365) target = $region68
    $region67: #{cbam_forward.1} parent=5 // pred_region
      %s369 = ssub.s32 %s20, 1
      %p370 = scmp.lt.s32.totalorder %s25, 1
      %s371 = scalar_select %p370, %s25, 1
      %s372 = smul.addr %s371, 2
      %s373 = smul.addr %s372, 4
      %s374 = scalar_lea.vmem %s0, %s373
      %p375 = pneg %p46
      %p376 = pneg %p43
      %p377 = pneg %p67
      %p378 = pneg %p64
      %p379 = pneg %p88
      %p380 = pneg %p85
      %p381 = pneg %p109
      %p382 = pneg %p106
      %p383 = pneg %p130
      %p384 = pneg %p127
      %p385 = pneg %p151
      %p386 = pneg %p148
      %p387 = pneg %p172
      %p388 = pneg %p169
      %p389 = pneg %p193
      %p390 = pneg %p190
      %p391 = pneg %p214
      %p392 = pneg %p211
      %p393 = pneg %p235
      %p394 = pneg %p232
      %p395 = pneg %p256
      %p396 = pneg %p253
      %p397 = pneg %p277
      %p398 = pneg %p274
      %p399 = pneg %p303
      %p400 = pneg %p300
      %p401 = scmp.lt.s32.totalorder %s25, 1
      %s402 = scalar_select %p401, %s25, 1
      %s403 = smul.addr %s402, 2
      %s404 = smul.addr %s403, 4
      %s405 = scalar_lea.vmem %s12, %s404
      %p406 = scmp.lt.s32.totalorder %s25, 1
      %s407 = scalar_select %p406, %s25, 1
      %s408 = smul.addr %s407, 2
      %s409 = smul.addr %s408, 4
      %s410 = scalar_lea.vmem %s0, %s409
      %p411 = scmp.lt.s32.totalorder %s25, 1
      %s412 = scalar_select %p411, %s25, 1
      %s413 = smul.addr %s412, 2
      %s414 = smul.addr %s413, 4
      %s415 = scalar_lea.vmem %s12, %s414
      %v416 = vld [vmem:[%s410] sm:$0xff]
      %v418 = vcombine.high %v416, %v416
      %vm420 = vcmask 1043456
      %v421 = vsel %vm420, %v416, -inf
      %v422 = vsel %vm420, %v418, -inf
      %v423 = vmax.f32 %v421, %v422
      %424 = vmax.xlane.f32.xlu0 %v423
      %v425 = vpop.xlane.xlu0 %424
      %v426 = vsel %vm420, %v416, 0.0
      %v427 = vsel %vm420, %v418, 0.0
      %v428 = vadd.f32 %v426, %v427
      %429 = vadd.xlane.f32.xlu0 %v428
      %v430 = vpop.xlane.xlu0 %429
      %v431 = vmul.f32 %v430, 0.00390625
      %v432 = vld [vmem:[%s1] sm:$0x3]
      %v433 = vld [vmem:[%s2] sm:$0x3]
      %v434 = vld [vmem:[%s3] sm:$0xf]
      %v435 = vld [vmem:[%s4] sm:$0xf]
      %vm436 = vcmask 31744
      %v438 = vsel %vm436, %v432, 0
      %v441 = vsel %vm420, %v425, 0
      %443 = vmatprep.subr.mxu0 0.0
      %444 = vmatpush1.msra.mxu0 0.0
      %445 = vmatprep.subr.mxu0 0.0
      %446 = vmatpush1.msra.mxu0 0.0
      %447 = vmatprep.subr.mxu0 0.0
      %448 = vmatpush1.msra.mxu0 0.0
      %449 = vmatprep.subr.mxu0 0.0
      %450 = vmatpush1.msra.mxu0 0.0
      %451 = vmatprep.subr.mxu0 0.0
      %452 = vmatpush1.msra.mxu0 0.0
      %453 = vmatprep.subr.mxu0 0.0
      %454 = vmatpush1.msra.mxu0 0.0
      %455 = vmatprep.subr.mxu0 0.0
      %456 = vmatpush1.msra.mxu0 0.0
      %457 = vmatprep.subr.mxu0 0.0
      %458 = vmatpush1.msra.mxu0 0.0
      %459 = vmatprep.subr.mxu0 0.0
      %460 = vmatpush1.msra.mxu0 0.0
      %461 = vmatprep.subr.mxu0 0.0
      %462 = vmatpush1.msra.mxu0 0.0
      %463 = vmatprep.subr.mxu0 0.0
      %464 = vmatpush1.msra.mxu0 0.0
      %465 = vmatprep.subr.mxu0 0.0
      %466 = vmatpush1.msra.mxu0 0.0
      %467 = vmatprep.subr.mxu0 0.0
      %468 = vmatpush1.msra.mxu0 0.0
      %469 = vmatprep.subr.mxu0 0.0
      %470 = vmatpush1.msra.mxu0 0.0
      %471 = vmatprep.subr.mxu0 0.0
      %472 = vmatpush1.msra.mxu0 0.0
      %473 = vmatprep.subr.mxu0 0.0
      %474 = vmatpush1.msra.mxu0 %v441
      %475 = vmatprep.subr.mxu0 0.0
      %476 = vmatpush2.msra.mxu0 0.0
      %477 = vmatprep.subr.mxu0 0.0
      %478 = vmatpush2.msra.mxu0 0.0
      %479 = vmatprep.subr.mxu0 0.0
      %480 = vmatpush2.msra.mxu0 0.0
      %481 = vmatprep.subr.mxu0 0.0
      %482 = vmatpush2.msra.mxu0 0.0
      %483 = vmatprep.subr.mxu0 0.0
      %484 = vmatpush2.msra.mxu0 0.0
      %485 = vmatprep.subr.mxu0 0.0
      %486 = vmatpush2.msra.mxu0 0.0
      %487 = vmatprep.subr.mxu0 0.0
      %488 = vmatpush2.msra.mxu0 0.0
      %489 = vmatprep.subr.mxu0 0.0
      %490 = vmatpush2.msra.mxu0 0.0
      %491 = vmatprep.subr.mxu0 0.0
      %492 = vmatpush2.msra.mxu0 0.0
      %493 = vmatprep.subr.mxu0 0.0
      %494 = vmatpush2.msra.mxu0 0.0
      %495 = vmatprep.subr.mxu0 0.0
      %496 = vmatpush2.msra.mxu0 0.0
      %497 = vmatprep.subr.mxu0 0.0
      %498 = vmatpush2.msra.mxu0 0.0
      %499 = vmatprep.subr.mxu0 0.0
      %500 = vmatpush2.msra.mxu0 0.0
      %501 = vmatprep.subr.mxu0 0.0
      %502 = vmatpush2.msra.mxu0 0.0
      %503 = vmatprep.subr.mxu0 0.0
      %504 = vmatpush2.msra.mxu0 0.0
      %505 = vmatprep.subr.mxu0 0.0
      %506 = vmatpush2.msra.mxu0 0.0
      %507 = vmatprep.mubr.f32.mxu0 0.0
      %508 = vmatmul.mubr.f32.gmra.mxu0 %v438
      %v509 = vpop.f32.mrf.mxu0
      %v510 = vadd.f32 %v433, %v509
      %v511 = vpop.f32.mrf.mxu0
      %512 = vdwg.mxu0
      %v513 = vmax.f32 %v510, 0.0
      %vm514 = vcmask 15360
      %v516 = vsel %vm514, %v434, 0
      %vm518 = vcmask 1041408
      %v520 = vsel %vm518, %v513, 0
      %522 = vmatprep.subr.mxu0 0.0
      %523 = vmatpush1.msra.mxu0 0.0
      %524 = vmatprep.subr.mxu0 0.0
      %525 = vmatpush1.msra.mxu0 0.0
      %526 = vmatprep.subr.mxu0 0.0
      %527 = vmatpush1.msra.mxu0 0.0
      %528 = vmatprep.subr.mxu0 0.0
      %529 = vmatpush1.msra.mxu0 0.0
      %530 = vmatprep.subr.mxu0 0.0
      %531 = vmatpush1.msra.mxu0 0.0
      %532 = vmatprep.subr.mxu0 0.0
      %533 = vmatpush1.msra.mxu0 0.0
      %534 = vmatprep.subr.mxu0 0.0
      %535 = vmatpush1.msra.mxu0 0.0
      %536 = vmatprep.subr.mxu0 0.0
      %537 = vmatpush1.msra.mxu0 0.0
      %538 = vmatprep.subr.mxu0 0.0
      %539 = vmatpush1.msra.mxu0 0.0
      %540 = vmatprep.subr.mxu0 0.0
      %541 = vmatpush1.msra.mxu0 0.0
      %542 = vmatprep.subr.mxu0 0.0
      %543 = vmatpush1.msra.mxu0 0.0
      %544 = vmatprep.subr.mxu0 0.0
      %545 = vmatpush1.msra.mxu0 0.0
      %546 = vmatprep.subr.mxu0 0.0
      %547 = vmatpush1.msra.mxu0 0.0
      %548 = vmatprep.subr.mxu0 0.0
      %549 = vmatpush1.msra.mxu0 0.0
      %550 = vmatprep.subr.mxu0 0.0
      %551 = vmatpush1.msra.mxu0 0.0
      %552 = vmatprep.subr.mxu0 0.0
      %553 = vmatpush1.msra.mxu0 %v520
      %554 = vmatprep.subr.mxu0 0.0
      %555 = vmatpush2.msra.mxu0 0.0
      %556 = vmatprep.subr.mxu0 0.0
      %557 = vmatpush2.msra.mxu0 0.0
      %558 = vmatprep.subr.mxu0 0.0
      %559 = vmatpush2.msra.mxu0 0.0
      %560 = vmatprep.subr.mxu0 0.0
      %561 = vmatpush2.msra.mxu0 0.0
      %562 = vmatprep.subr.mxu0 0.0
      %563 = vmatpush2.msra.mxu0 0.0
      %564 = vmatprep.subr.mxu0 0.0
      %565 = vmatpush2.msra.mxu0 0.0
      %566 = vmatprep.subr.mxu0 0.0
      %567 = vmatpush2.msra.mxu0 0.0
      %568 = vmatprep.subr.mxu0 0.0
      %569 = vmatpush2.msra.mxu0 0.0
      %570 = vmatprep.subr.mxu0 0.0
      %571 = vmatpush2.msra.mxu0 0.0
      %572 = vmatprep.subr.mxu0 0.0
      %573 = vmatpush2.msra.mxu0 0.0
      %574 = vmatprep.subr.mxu0 0.0
      %575 = vmatpush2.msra.mxu0 0.0
      %576 = vmatprep.subr.mxu0 0.0
      %577 = vmatpush2.msra.mxu0 0.0
      %578 = vmatprep.subr.mxu0 0.0
      %579 = vmatpush2.msra.mxu0 0.0
      %580 = vmatprep.subr.mxu0 0.0
      %581 = vmatpush2.msra.mxu0 0.0
      %582 = vmatprep.subr.mxu0 0.0
      %583 = vmatpush2.msra.mxu0 0.0
      %584 = vmatprep.subr.mxu0 0.0
      %585 = vmatpush2.msra.mxu0 0.0
      %586 = vmatprep.mubr.f32.mxu0 0.0
      %587 = vmatmul.mubr.f32.gmra.mxu0 %v516
      %v588 = vpop.f32.mrf.mxu0
      %v589 = vadd.f32 %v435, %v588
      %v590 = vpop.f32.mrf.mxu0
      %591 = vdwg.mxu0
      %v592 = vsub.f32 0.0, %v589
      %v593 = vmul.f32 %v592, 1.442695
      %v594 = vpow.pop %v593
      %v595 = vadd.f32 %v594, 1.0
      %v596 = vrcp.pop %v595
      %v597 = vmul.f32 1.0, %v596
      %v598 = vld [vmem:[%s5] sm:$0x3]
      %v599 = vld [vmem:[%s6] sm:$0x3]
      %v600 = vld [vmem:[%s7] sm:$0xf]
      %v601 = vld [vmem:[%s8] sm:$0xf]
      %v603 = vsel %vm436, %v598, 0
      %v606 = vsel %vm420, %v431, 0
      %608 = vmatprep.subr.mxu0 0.0
      %609 = vmatpush1.msra.mxu0 0.0
      %610 = vmatprep.subr.mxu0 0.0
      %611 = vmatpush1.msra.mxu0 0.0
      %612 = vmatprep.subr.mxu0 0.0
      %613 = vmatpush1.msra.mxu0 0.0
      %614 = vmatprep.subr.mxu0 0.0
      %615 = vmatpush1.msra.mxu0 0.0
      %616 = vmatprep.subr.mxu0 0.0
      %617 = vmatpush1.msra.mxu0 0.0
      %618 = vmatprep.subr.mxu0 0.0
      %619 = vmatpush1.msra.mxu0 0.0
      %620 = vmatprep.subr.mxu0 0.0
      %621 = vmatpush1.msra.mxu0 0.0
      %622 = vmatprep.subr.mxu0 0.0
      %623 = vmatpush1.msra.mxu0 0.0
      %624 = vmatprep.subr.mxu0 0.0
      %625 = vmatpush1.msra.mxu0 0.0
      %626 = vmatprep.subr.mxu0 0.0
      %627 = vmatpush1.msra.mxu0 0.0
      %628 = vmatprep.subr.mxu0 0.0
      %629 = vmatpush1.msra.mxu0 0.0
      %630 = vmatprep.subr.mxu0 0.0
      %631 = vmatpush1.msra.mxu0 0.0
      %632 = vmatprep.subr.mxu0 0.0
      %633 = vmatpush1.msra.mxu0 0.0
      %634 = vmatprep.subr.mxu0 0.0
      %635 = vmatpush1.msra.mxu0 0.0
      %636 = vmatprep.subr.mxu0 0.0
      %637 = vmatpush1.msra.mxu0 0.0
      %638 = vmatprep.subr.mxu0 0.0
      %639 = vmatpush1.msra.mxu0 %v606
      %640 = vmatprep.subr.mxu0 0.0
      %641 = vmatpush2.msra.mxu0 0.0
      %642 = vmatprep.subr.mxu0 0.0
      %643 = vmatpush2.msra.mxu0 0.0
      %644 = vmatprep.subr.mxu0 0.0
      %645 = vmatpush2.msra.mxu0 0.0
      %646 = vmatprep.subr.mxu0 0.0
      %647 = vmatpush2.msra.mxu0 0.0
      %648 = vmatprep.subr.mxu0 0.0
      %649 = vmatpush2.msra.mxu0 0.0
      %650 = vmatprep.subr.mxu0 0.0
      %651 = vmatpush2.msra.mxu0 0.0
      %652 = vmatprep.subr.mxu0 0.0
      %653 = vmatpush2.msra.mxu0 0.0
      %654 = vmatprep.subr.mxu0 0.0
      %655 = vmatpush2.msra.mxu0 0.0
      %656 = vmatprep.subr.mxu0 0.0
      %657 = vmatpush2.msra.mxu0 0.0
      %658 = vmatprep.subr.mxu0 0.0
      %659 = vmatpush2.msra.mxu0 0.0
      %660 = vmatprep.subr.mxu0 0.0
      %661 = vmatpush2.msra.mxu0 0.0
      %662 = vmatprep.subr.mxu0 0.0
      %663 = vmatpush2.msra.mxu0 0.0
      %664 = vmatprep.subr.mxu0 0.0
      %665 = vmatpush2.msra.mxu0 0.0
      %666 = vmatprep.subr.mxu0 0.0
      %667 = vmatpush2.msra.mxu0 0.0
      %668 = vmatprep.subr.mxu0 0.0
      %669 = vmatpush2.msra.mxu0 0.0
      %670 = vmatprep.subr.mxu0 0.0
      %671 = vmatpush2.msra.mxu0 0.0
      %672 = vmatprep.mubr.f32.mxu0 0.0
      %673 = vmatmul.mubr.f32.gmra.mxu0 %v603
      %v674 = vpop.f32.mrf.mxu0
      %v675 = vadd.f32 %v599, %v674
      %v676 = vpop.f32.mrf.mxu0
      %677 = vdwg.mxu0
      %v678 = vmax.f32 %v675, 0.0
      %v680 = vsel %vm514, %v600, 0
      %v683 = vsel %vm518, %v678, 0
      %685 = vmatprep.subr.mxu0 0.0
      %686 = vmatpush1.msra.mxu0 0.0
      %687 = vmatprep.subr.mxu0 0.0
      %688 = vmatpush1.msra.mxu0 0.0
      %689 = vmatprep.subr.mxu0 0.0
      %690 = vmatpush1.msra.mxu0 0.0
      %691 = vmatprep.subr.mxu0 0.0
      %692 = vmatpush1.msra.mxu0 0.0
      %693 = vmatprep.subr.mxu0 0.0
      %694 = vmatpush1.msra.mxu0 0.0
      %695 = vmatprep.subr.mxu0 0.0
      %696 = vmatpush1.msra.mxu0 0.0
      %697 = vmatprep.subr.mxu0 0.0
      %698 = vmatpush1.msra.mxu0 0.0
      %699 = vmatprep.subr.mxu0 0.0
      %700 = vmatpush1.msra.mxu0 0.0
      %701 = vmatprep.subr.mxu0 0.0
      %702 = vmatpush1.msra.mxu0 0.0
      %703 = vmatprep.subr.mxu0 0.0
      %704 = vmatpush1.msra.mxu0 0.0
      %705 = vmatprep.subr.mxu0 0.0
      %706 = vmatpush1.msra.mxu0 0.0
      %707 = vmatprep.subr.mxu0 0.0
      %708 = vmatpush1.msra.mxu0 0.0
      %709 = vmatprep.subr.mxu0 0.0
      %710 = vmatpush1.msra.mxu0 0.0
      %711 = vmatprep.subr.mxu0 0.0
      %712 = vmatpush1.msra.mxu0 0.0
      %713 = vmatprep.subr.mxu0 0.0
      %714 = vmatpush1.msra.mxu0 0.0
      %715 = vmatprep.subr.mxu0 0.0
      %716 = vmatpush1.msra.mxu0 %v683
      %717 = vmatprep.subr.mxu0 0.0
      %718 = vmatpush2.msra.mxu0 0.0
      %719 = vmatprep.subr.mxu0 0.0
      %720 = vmatpush2.msra.mxu0 0.0
      %721 = vmatprep.subr.mxu0 0.0
      %722 = vmatpush2.msra.mxu0 0.0
      %723 = vmatprep.subr.mxu0 0.0
      %724 = vmatpush2.msra.mxu0 0.0
      %725 = vmatprep.subr.mxu0 0.0
      %726 = vmatpush2.msra.mxu0 0.0
      %727 = vmatprep.subr.mxu0 0.0
      %728 = vmatpush2.msra.mxu0 0.0
      %729 = vmatprep.subr.mxu0 0.0
      %730 = vmatpush2.msra.mxu0 0.0
      %731 = vmatprep.subr.mxu0 0.0
      %732 = vmatpush2.msra.mxu0 0.0
      %733 = vmatprep.subr.mxu0 0.0
      %734 = vmatpush2.msra.mxu0 0.0
      %735 = vmatprep.subr.mxu0 0.0
      %736 = vmatpush2.msra.mxu0 0.0
      %737 = vmatprep.subr.mxu0 0.0
      %738 = vmatpush2.msra.mxu0 0.0
      %739 = vmatprep.subr.mxu0 0.0
      %740 = vmatpush2.msra.mxu0 0.0
      %741 = vmatprep.subr.mxu0 0.0
      %742 = vmatpush2.msra.mxu0 0.0
      %743 = vmatprep.subr.mxu0 0.0
      %744 = vmatpush2.msra.mxu0 0.0
      %745 = vmatprep.subr.mxu0 0.0
      %746 = vmatpush2.msra.mxu0 0.0
      %747 = vmatprep.subr.mxu0 0.0
      %748 = vmatpush2.msra.mxu0 0.0
      %749 = vmatprep.mubr.f32.mxu0 0.0
      %750 = vmatmul.mubr.f32.gmra.mxu0 %v680
      %v751 = vpop.f32.mrf.mxu0
      %v752 = vadd.f32 %v601, %v751
      %v753 = vpop.f32.mrf.mxu0
      %754 = vdwg.mxu0
      %v755 = vsub.f32 0.0, %v752
      %v756 = vmul.f32 %v755, 1.442695
      %v757 = vpow.pop %v756
      %v758 = vadd.f32 %v757, 1.0
      %v759 = vrcp.pop %v758
      %v760 = vmul.f32 1.0, %v759
      %v761 = vadd.f32 %v597, %v760
      %v762 = vsub.f32 0.0, %v761
      %v763 = vmul.f32 %v762, 1.442695
      %v764 = vpow.pop %v763
      %v765 = vadd.f32 %v764, 1.0
      %v766 = vrcp.pop %v765
      %v767 = vmul.f32 1.0, %v766
      %769 = vset.pattern.permute.xlu0 0
      %770 = vperm.xlu0 %769, %v767
      %v771 = vpop.permute.xlu0 %770
      %v773 = vunpack.c.l.s4 839922192
      %v774 = vunpack.c.0.s8 %v773
      %v775 = vlaneseq
      %v776 = vshrl.u32 %v775, 7
      %v777 = vsub.s32 %v774, %v776
      %v778 = vrot.slane %v771, %v777
      %v780 = vmul.f32 %v416, %v778
      %v782 = vcombine.high %v780, %v780
      %v784 = vsel %vm420, %v780, -inf
      %v785 = vrot.slane %v784, 4
      %v786 = vmax.f32 %v784, %v785
      %v787 = vrot.slane %v786, 2
      %v788 = vmax.f32 %v786, %v787
      %v789 = vrot.slane %v788, 1
      %v790 = vmax.f32 %v788, %v789
      %v791 = vsel %vm420, %v782, -inf
      %v792 = vrot.slane %v791, 4
      %v793 = vmax.f32 %v791, %v792
      %v794 = vrot.slane %v793, 2
      %v795 = vmax.f32 %v793, %v794
      %v796 = vrot.slane %v795, 1
      %v797 = vmax.f32 %v795, %v796
      %v798 = vsel %vm420, %v780, 0.0
      %v799 = vrot.slane %v798, 4
      %v800 = vadd.f32 %v798, %v799
      %v801 = vrot.slane %v800, 2
      %v802 = vadd.f32 %v800, %v801
      %v803 = vrot.slane %v802, 1
      %v804 = vadd.f32 %v802, %v803
      %v805 = vsel %vm420, %v782, 0.0
      %v806 = vrot.slane %v805, 4
      %v807 = vadd.f32 %v805, %v806
      %v808 = vrot.slane %v807, 2
      %v809 = vadd.f32 %v807, %v808
      %v810 = vrot.slane %v809, 1
      %v811 = vadd.f32 %v809, %v810
      %v812 = vmul.f32 %v804, 0.25
      %v813 = vmul.f32 %v811, 0.25
      %v814 = vld [vmem:[%s9] sm:$0xff]
      %v815 = vld [vmem:[%s9 + $0x8] sm:$0xff]
      %v816 = vld [vmem:[%s9 + $0x10] sm:$0xff]
      %v817 = vld [vmem:[%s9 + $0x18] sm:$0xff]
      %v818 = vld [vmem:[%s9 + $0x20] sm:$0xff]
      %v819 = vld [vmem:[%s9 + $0x28] sm:$0xff]
      %v820 = vld [vmem:[%s9 + $0x30] sm:$0xff]
      %v821 = vld [vmem:[%s9 + $0x38] sm:$0xff]
      %v822 = vld [vmem:[%s9 + $0x40] sm:$0xff]
      %v823 = vld [vmem:[%s9 + $0x48] sm:$0xff]
      %v824 = vld [vmem:[%s9 + $0x50] sm:$0xff]
      %v825 = vld [vmem:[%s9 + $0x58] sm:$0xff]
      %v826 = vld [vmem:[%s9 + $0x60] sm:$0xff]
      %v827 = vld [vmem:[%s9 + $0x68] sm:$0xff]
      %v828 = vld [vmem:[%s9 + $0x70] sm:$0xff]
      %v829 = vld [vmem:[%s9 + $0x78] sm:$0xff]
      %v830 = vld [vmem:[%s9 + $0x80] sm:$0xff]
      %v831 = vld [vmem:[%s9 + $0x88] sm:$0xff]
      %v832 = vld [vmem:[%s9 + $0x90] sm:$0xff]
      %v833 = vld [vmem:[%s9 + $0x98] sm:$0xff]
      %v834 = vld [vmem:[%s9 + $0xa0] sm:$0xff]
      %v835 = vld [vmem:[%s9 + $0xa8] sm:$0xff]
      %v836 = vld [vmem:[%s9 + $0xb0] sm:$0xff]
      %v837 = vld [vmem:[%s9 + $0xb8] sm:$0xff]
      %v838 = vld [vmem:[%s9 + $0xc0] sm:$0xff]
      %v839 = vld [vmem:[%s9 + $0xc8] sm:$0xff]
      %v840 = vld [vmem:[%s9 + $0xd0] sm:$0xff]
      %v841 = vld [vmem:[%s9 + $0xd8] sm:$0xff]
      %v842 = vld [vmem:[%s9 + $0xe0] sm:$0xff]
      %v843 = vld [vmem:[%s9 + $0xe8] sm:$0xff]
      %v844 = vld [vmem:[%s9 + $0xf0] sm:$0xff]
      %v845 = vld [vmem:[%s9 + $0xf8] sm:$0xff]
      %v846 = vld [vmem:[%s9 + $0x100] sm:$0xff]
      %v847 = vld [vmem:[%s9 + $0x108] sm:$0xff]
      %v848 = vld [vmem:[%s9 + $0x110] sm:$0xff]
      %v849 = vld [vmem:[%s9 + $0x118] sm:$0xff]
      %v850 = vld [vmem:[%s9 + $0x120] sm:$0xff]
      %v851 = vld [vmem:[%s9 + $0x128] sm:$0xff]
      %v852 = vld [vmem:[%s9 + $0x130] sm:$0xff]
      %v853 = vld [vmem:[%s9 + $0x138] sm:$0xff]
      %v854 = vld [vmem:[%s9 + $0x140] sm:$0xff]
      %v855 = vld [vmem:[%s9 + $0x148] sm:$0xff]
      %v856 = vld [vmem:[%s9 + $0x150] sm:$0xff]
      %v857 = vld [vmem:[%s9 + $0x158] sm:$0xff]
      %v858 = vld [vmem:[%s9 + $0x160] sm:$0xff]
      %v859 = vld [vmem:[%s9 + $0x168] sm:$0xff]
      %v860 = vld [vmem:[%s9 + $0x170] sm:$0xff]
      %v861 = vld [vmem:[%s9 + $0x178] sm:$0xff]
      %v862 = vld [vmem:[%s9 + $0x180] sm:$0xff]
      %v863 = vld [vmem:[%s9 + $0x188] sm:$0xff]
      %v864 = vld [vmem:[%s9 + $0x190] sm:$0xff]
      %v865 = vld [vmem:[%s9 + $0x198] sm:$0xff]
      %v866 = vld [vmem:[%s9 + $0x1a0] sm:$0xff]
      %v867 = vld [vmem:[%s9 + $0x1a8] sm:$0xff]
      %v868 = vld [vmem:[%s9 + $0x1b0] sm:$0xff]
      %v869 = vld [vmem:[%s9 + $0x1b8] sm:$0xff]
      %v870 = vld [vmem:[%s9 + $0x1c0] sm:$0xff]
      %v871 = vld [vmem:[%s9 + $0x1c8] sm:$0xff]
      %v872 = vld [vmem:[%s9 + $0x1d0] sm:$0xff]
      %v873 = vld [vmem:[%s9 + $0x1d8] sm:$0xff]
      %v874 = vld [vmem:[%s9 + $0x1e0] sm:$0xff]
      %v875 = vld [vmem:[%s9 + $0x1e8] sm:$0xff]
      %v876 = vld [vmem:[%s9 + $0x1f0] sm:$0xff]
      %v877 = vld [vmem:[%s9 + $0x1f8] sm:$0xff]
      %v878 = vld [vmem:[%s10] sm:$0xff]
      %v879 = vld [vmem:[%s10 + $0x8] sm:$0xff]
      %v880 = vld [vmem:[%s10 + $0x10] sm:$0xff]
      %v881 = vld [vmem:[%s10 + $0x18] sm:$0xff]
      %v882 = vld [vmem:[%s10 + $0x20] sm:$0xff]
      %v883 = vld [vmem:[%s10 + $0x28] sm:$0xff]
      %v884 = vld [vmem:[%s10 + $0x30] sm:$0xff]
      %v885 = vld [vmem:[%s10 + $0x38] sm:$0xff]
      %v886 = vld [vmem:[%s10 + $0x40] sm:$0xff]
      %v887 = vld [vmem:[%s10 + $0x48] sm:$0xff]
      %v888 = vld [vmem:[%s10 + $0x50] sm:$0xff]
      %v889 = vld [vmem:[%s10 + $0x58] sm:$0xff]
      %v890 = vld [vmem:[%s10 + $0x60] sm:$0xff]
      %v891 = vld [vmem:[%s10 + $0x68] sm:$0xff]
      %v892 = vld [vmem:[%s10 + $0x70] sm:$0xff]
      %v893 = vld [vmem:[%s10 + $0x78] sm:$0xff]
      %v894 = vld [vmem:[%s10 + $0x80] sm:$0xff]
      %v895 = vld [vmem:[%s10 + $0x88] sm:$0xff]
      %v896 = vld [vmem:[%s10 + $0x90] sm:$0xff]
      %v897 = vld [vmem:[%s10 + $0x98] sm:$0xff]
      %v898 = vld [vmem:[%s10 + $0xa0] sm:$0xff]
      %v899 = vld [vmem:[%s10 + $0xa8] sm:$0xff]
      %v900 = vld [vmem:[%s10 + $0xb0] sm:$0xff]
      %v901 = vld [vmem:[%s10 + $0xb8] sm:$0xff]
      %v902 = vld [vmem:[%s10 + $0xc0] sm:$0xff]
      %v903 = vld [vmem:[%s10 + $0xc8] sm:$0xff]
      %v904 = vld [vmem:[%s10 + $0xd0] sm:$0xff]
      %v905 = vld [vmem:[%s10 + $0xd8] sm:$0xff]
      %v906 = vld [vmem:[%s10 + $0xe0] sm:$0xff]
      %v907 = vld [vmem:[%s10 + $0xe8] sm:$0xff]
      %v908 = vld [vmem:[%s10 + $0xf0] sm:$0xff]
      %v909 = vld [vmem:[%s10 + $0xf8] sm:$0xff]
      %v910 = vld [vmem:[%s10 + $0x100] sm:$0xff]
      %v911 = vld [vmem:[%s10 + $0x108] sm:$0xff]
      %v912 = vld [vmem:[%s10 + $0x110] sm:$0xff]
      %v913 = vld [vmem:[%s10 + $0x118] sm:$0xff]
      %v914 = vld [vmem:[%s10 + $0x120] sm:$0xff]
      %v915 = vld [vmem:[%s10 + $0x128] sm:$0xff]
      %v916 = vld [vmem:[%s10 + $0x130] sm:$0xff]
      %v917 = vld [vmem:[%s10 + $0x138] sm:$0xff]
      %v918 = vld [vmem:[%s10 + $0x140] sm:$0xff]
      %v919 = vld [vmem:[%s10 + $0x148] sm:$0xff]
      %v920 = vld [vmem:[%s10 + $0x150] sm:$0xff]
      %v921 = vld [vmem:[%s10 + $0x158] sm:$0xff]
      %v922 = vld [vmem:[%s10 + $0x160] sm:$0xff]
      %v923 = vld [vmem:[%s10 + $0x168] sm:$0xff]
      %v924 = vld [vmem:[%s10 + $0x170] sm:$0xff]
      %v925 = vld [vmem:[%s10 + $0x178] sm:$0xff]
      %v926 = vld [vmem:[%s10 + $0x180] sm:$0xff]
      %v927 = vld [vmem:[%s10 + $0x188] sm:$0xff]
      %v928 = vld [vmem:[%s10 + $0x190] sm:$0xff]
      %v929 = vld [vmem:[%s10 + $0x198] sm:$0xff]
      %v930 = vld [vmem:[%s10 + $0x1a0] sm:$0xff]
      %v931 = vld [vmem:[%s10 + $0x1a8] sm:$0xff]
      %v932 = vld [vmem:[%s10 + $0x1b0] sm:$0xff]
      %v933 = vld [vmem:[%s10 + $0x1b8] sm:$0xff]
      %v934 = vld [vmem:[%s10 + $0x1c0] sm:$0xff]
      %v935 = vld [vmem:[%s10 + $0x1c8] sm:$0xff]
      %v936 = vld [vmem:[%s10 + $0x1d0] sm:$0xff]
      %v937 = vld [vmem:[%s10 + $0x1d8] sm:$0xff]
      %v938 = vld [vmem:[%s10 + $0x1e0] sm:$0xff]
      %v939 = vld [vmem:[%s10 + $0x1e8] sm:$0xff]
      %v940 = vld [vmem:[%s10 + $0x1f0] sm:$0xff]
      %v941 = vld [vmem:[%s10 + $0x1f8] sm:$0xff]
      %942 = vmatprep.subr.mxu0 %v909
      %943 = vmatpush1.msra.mxu0 %v908
      %944 = vmatprep.subr.mxu0 %v907
      %945 = vmatpush1.msra.mxu0 %v906
      %946 = vmatprep.subr.mxu0 %v905
      %947 = vmatpush1.msra.mxu0 %v904
      %948 = vmatprep.subr.mxu0 %v903
      %949 = vmatpush1.msra.mxu0 %v902
      %950 = vmatprep.subr.mxu0 %v901
      %951 = vmatpush1.msra.mxu0 %v900
      %952 = vmatprep.subr.mxu0 %v899
      %953 = vmatpush1.msra.mxu0 %v898
      %954 = vmatprep.subr.mxu0 %v897
      %955 = vmatpush1.msra.mxu0 %v896
      %956 = vmatprep.subr.mxu0 %v895
      %957 = vmatpush1.msra.mxu0 %v894
      %958 = vmatprep.subr.mxu0 %v893
      %959 = vmatpush1.msra.mxu0 %v892
      %960 = vmatprep.subr.mxu0 %v891
      %961 = vmatpush1.msra.mxu0 %v890
      %962 = vmatprep.subr.mxu0 %v889
      %963 = vmatpush1.msra.mxu0 %v888
      %964 = vmatprep.subr.mxu0 %v887
      %965 = vmatpush1.msra.mxu0 %v886
      %966 = vmatprep.subr.mxu0 %v885
      %967 = vmatpush1.msra.mxu0 %v884
      %968 = vmatprep.subr.mxu0 %v883
      %969 = vmatpush1.msra.mxu0 %v882
      %970 = vmatprep.subr.mxu0 %v881
      %971 = vmatpush1.msra.mxu0 %v880
      %972 = vmatprep.subr.mxu0 %v879
      %973 = vmatpush1.msra.mxu0 %v878
      %974 = vmatprep.subr.mxu0 %v941
      %975 = vmatpush2.msra.mxu0 %v940
      %976 = vmatprep.subr.mxu0 %v939
      %977 = vmatpush2.msra.mxu0 %v938
      %978 = vmatprep.subr.mxu0 %v937
      %979 = vmatpush2.msra.mxu0 %v936
      %980 = vmatprep.subr.mxu0 %v935
      %981 = vmatpush2.msra.mxu0 %v934
      %982 = vmatprep.subr.mxu0 %v933
      %983 = vmatpush2.msra.mxu0 %v932
      %984 = vmatprep.subr.mxu0 %v931
      %985 = vmatpush2.msra.mxu0 %v930
      %986 = vmatprep.subr.mxu0 %v929
      %987 = vmatpush2.msra.mxu0 %v928
      %988 = vmatprep.subr.mxu0 %v927
      %989 = vmatpush2.msra.mxu0 %v926
      %990 = vmatprep.subr.mxu0 %v925
      %991 = vmatpush2.msra.mxu0 %v924
      %992 = vmatprep.subr.mxu0 %v923
      %993 = vmatpush2.msra.mxu0 %v922
      %994 = vmatprep.subr.mxu0 %v921
      %995 = vmatpush2.msra.mxu0 %v920
      %996 = vmatprep.subr.mxu0 %v919
      %997 = vmatpush2.msra.mxu0 %v918
      %998 = vmatprep.subr.mxu0 %v917
      %999 = vmatpush2.msra.mxu0 %v916
      %1000 = vmatprep.subr.mxu0 %v915
      %1001 = vmatpush2.msra.mxu0 %v914
      %1002 = vmatprep.subr.mxu0 %v913
      %1003 = vmatpush2.msra.mxu0 %v912
      %1004 = vmatprep.subr.mxu0 %v911
      %1005 = vmatpush2.msra.mxu0 %v910
      %1006 = vmatprep.mubr.f32.mxu0 %v813
      %1007 = vmatmul.mubr.f32.gmra.mxu0 %v812
      %v1008 = vpop.f32.mrf.mxu0
      %v1009 = vadd.f32 0.0, %v1008
      %v1010 = vpop.f32.mrf.mxu0
      %v1011 = vadd.f32 0.0, %v1010
      %1012 = vdwg.mxu0
      %1013 = vmatprep.subr.mxu0 %v845
      %1014 = vmatpush1.msra.mxu0 %v844
      %1015 = vmatprep.subr.mxu0 %v843
      %1016 = vmatpush1.msra.mxu0 %v842
      %1017 = vmatprep.subr.mxu0 %v841
      %1018 = vmatpush1.msra.mxu0 %v840
      %1019 = vmatprep.subr.mxu0 %v839
      %1020 = vmatpush1.msra.mxu0 %v838
      %1021 = vmatprep.subr.mxu0 %v837
      %1022 = vmatpush1.msra.mxu0 %v836
      %1023 = vmatprep.subr.mxu0 %v835
      %1024 = vmatpush1.msra.mxu0 %v834
      %1025 = vmatprep.subr.mxu0 %v833
      %1026 = vmatpush1.msra.mxu0 %v832
      %1027 = vmatprep.subr.mxu0 %v831
      %1028 = vmatpush1.msra.mxu0 %v830
      %1029 = vmatprep.subr.mxu0 %v829
      %1030 = vmatpush1.msra.mxu0 %v828
      %1031 = vmatprep.subr.mxu0 %v827
      %1032 = vmatpush1.msra.mxu0 %v826
      %1033 = vmatprep.subr.mxu0 %v825
      %1034 = vmatpush1.msra.mxu0 %v824
      %1035 = vmatprep.subr.mxu0 %v823
      %1036 = vmatpush1.msra.mxu0 %v822
      %1037 = vmatprep.subr.mxu0 %v821
      %1038 = vmatpush1.msra.mxu0 %v820
      %1039 = vmatprep.subr.mxu0 %v819
      %1040 = vmatpush1.msra.mxu0 %v818
      %1041 = vmatprep.subr.mxu0 %v817
      %1042 = vmatpush1.msra.mxu0 %v816
      %1043 = vmatprep.subr.mxu0 %v815
      %1044 = vmatpush1.msra.mxu0 %v814
      %1045 = vmatprep.subr.mxu0 %v877
      %1046 = vmatpush2.msra.mxu0 %v876
      %1047 = vmatprep.subr.mxu0 %v875
      %1048 = vmatpush2.msra.mxu0 %v874
      %1049 = vmatprep.subr.mxu0 %v873
      %1050 = vmatpush2.msra.mxu0 %v872
      %1051 = vmatprep.subr.mxu0 %v871
      %1052 = vmatpush2.msra.mxu0 %v870
      %1053 = vmatprep.subr.mxu0 %v869
      %1054 = vmatpush2.msra.mxu0 %v868
      %1055 = vmatprep.subr.mxu0 %v867
      %1056 = vmatpush2.msra.mxu0 %v866
      %1057 = vmatprep.subr.mxu0 %v865
      %1058 = vmatpush2.msra.mxu0 %v864
      %1059 = vmatprep.subr.mxu0 %v863
      %1060 = vmatpush2.msra.mxu0 %v862
      %1061 = vmatprep.subr.mxu0 %v861
      %1062 = vmatpush2.msra.mxu0 %v860
      %1063 = vmatprep.subr.mxu0 %v859
      %1064 = vmatpush2.msra.mxu0 %v858
      %1065 = vmatprep.subr.mxu0 %v857
      %1066 = vmatpush2.msra.mxu0 %v856
      %1067 = vmatprep.subr.mxu0 %v855
      %1068 = vmatpush2.msra.mxu0 %v854
      %1069 = vmatprep.subr.mxu0 %v853
      %1070 = vmatpush2.msra.mxu0 %v852
      %1071 = vmatprep.subr.mxu0 %v851
      %1072 = vmatpush2.msra.mxu0 %v850
      %1073 = vmatprep.subr.mxu0 %v849
      %1074 = vmatpush2.msra.mxu0 %v848
      %1075 = vmatprep.subr.mxu0 %v847
      %1076 = vmatpush2.msra.mxu0 %v846
      %1077 = vmatprep.mubr.f32.mxu0 %v797
      %1078 = vmatmul.mubr.f32.gmra.mxu0 %v790
      %v1079 = vpop.f32.mrf.mxu0
      %v1080 = vadd.f32 %v1009, %v1079
      %v1081 = vpop.f32.mrf.mxu0
      %v1082 = vadd.f32 %v1011, %v1081
      %1083 = vdwg.mxu0
      %v1084 = vld [vmem:[#allocation2] sm:$0x1]
      %1086 = vset.pattern.permute.xlu0 0
      %1087 = vperm.xlu0 %1086, %v1084
      %v1088 = vpop.permute.xlu0 %1087
      %v1090 = vlaneseq
      %v1091 = vshrl.u32 %v1090, 7
      %v1092 = vsub.s32 0, %v1091
      %v1093 = vrot.slane %v1088, %v1092
      %v1094 = vadd.f32 %v1080, %v1093
      %v1095 = vadd.f32 %v1082, %v1093
      %v1096 = vsub.f32 0.0, %v1094
      %v1097 = vsub.f32 0.0, %v1095
      %v1098 = vmul.f32 %v1096, 1.442695
      %v1099 = vpow.pop %v1098
      %v1100 = vmul.f32 %v1097, 1.442695
      %v1101 = vpow.pop %v1100
      %v1102 = vadd.f32 %v1099, 1.0
      %v1103 = vadd.f32 %v1101, 1.0
      %v1104 = vrcp.pop %v1102
      %v1105 = vmul.f32 1.0, %v1104
      %v1106 = vrcp.pop %v1103
      %v1107 = vmul.f32 1.0, %v1106
      %v1108 = vlaneseq
      %v1109 = vshrl.u32 %v1108, 7
      %v1110 = vsub.s32 0, %v1109
      %v1111 = vrot.slane %v1105, %v1110
      %v1112 = vlaneseq
      %v1113 = vshrl.u32 %v1112, 7
      %v1114 = vsub.s32 0, %v1113
      %v1115 = vrot.slane %v1107, %v1114
      %v1118 = vcombine.low %v1111, %v1115
      %v1120 = vmul.f32 %v780, %v1118
      %1121 = vst [vmem:[%s415] sm:$0xff] %v1120
      %p1122 = scmp.lt.s32.totalorder %s25, 1
      %s1123 = scalar_select %p1122, %s25, 1
      %s1124 = smul.addr %s1123, 2
      %s1125 = smul.addr %s1124, 4
      %s1126 = scalar_lea.vmem %s12, %s1125
      // Predicated region
      $region69: #{cbam_forward.1} parent=67 // pred_check
        %p1127 = pneg %p300
      $region70: #{cbam_forward.1} parent=67 // pred_check_branch
        %1129 = sbr.rel (%p1127) target = $region72
      $region71: #{cbam_forward.1} parent=67 // pred_region
        _
      $region72: #{cbam_forward.1} parent=67 // pred_fallthru
        _
    $region68: #{cbam_forward.1} parent=5 // pred_fallthru
      _
    %p1130 = scmp.le.s32.totalorder 2, %s20
    // Predicated region
    $region73: #{cbam_forward.1} parent=5 // pred_check
      %p1131 = pneg %p1130
    $region74: #{cbam_forward.1} parent=5 // pred_check_branch
      %1133 = sbr.rel (%p1131) target = $region76
    $region75: #{cbam_forward.1} parent=5 // pred_region
      %s1134 = ssub.s32 %s20, 2
      // Predicated region
      $region77: #{cbam_forward.1} parent=75 // pred_check
        %p1135 = pneg %p306
      $region78: #{cbam_forward.1} parent=75 // pred_check_branch
        %1137 = sbr.rel (%p1135) target = $region80
      $region79: #{cbam_forward.1} parent=75 // pred_region
        %p1138 = scmp.lt.s32.totalorder %s26, 1
        %s1139 = scalar_select %p1138, %s26, 1
        %s1140 = smul.addr %s1139, 2
        %s1141 = smul.addr %s1140, 4
        %s1142 = scalar_lea.vmem %s12, %s1141
      $region80: #{cbam_forward.1} parent=75 // pred_fallthru
        _
    $region76: #{cbam_forward.1} parent=5 // pred_fallthru
      _
  $region6: #{cbam_forward.1} parent=0 // loop_footer
    %s24 = sadd.s32 1, %s20
  $region7: #{cbam_forward.1} parent=0 // loop_footer_branch
    %19 = sbr.rel target = $region3
  $region8: #{cbam_forward.1} parent=0 // loop_exit
    _

</llo_original>
